<compile_context>
chip_gen: v5e
topology: v5e:2x2
jax: 0.10.0
libtpu: 0.0.40
codegen_flags: <defaults>
</compile_context>

<pallas_src>
import jax
import jax.numpy as jnp
from jax.experimental import pallas as pl
from jax.experimental.pallas import tpu as pltpu

HISTOGRAM_SIZE = 256
TRAIN_VECTOR_SIZE = HISTOGRAM_SIZE * 2  # 512


def _round_up(n, m):
    return ((n + m - 1) // m) * m


def _linear_sigmoid_kernel(x_ref, w_ref, b_ref, o_ref):
    # x_ref: [TB, 512] VMEM   w_ref: [1, 512] VMEM   b_ref: [1, 1] SMEM
    # o_ref: [1, 1, TB] VMEM  (lane-dense output slab)
    x = x_ref[...]                                  # [TB, 512]
    w = w_ref[...]                                  # [1, 512], broadcast over rows
    # VPU multiply + XLU lane-reduce instead of an N=1 MXU matmul.
    y = jnp.sum(x * w, axis=-1) + b_ref[0, 0]       # [TB]
    o_ref[...] = jax.nn.sigmoid(y).reshape(o_ref.shape).astype(o_ref.dtype)


def neural_network_forward(x, w, b, *, block_b=2048):
    """Forward pass of NeuralNetwork: sigmoid(x @ w.T + b).

    x: [B, 512] f32
    w: [1, 512] f32 (PyTorch nn.Linear layout) -- [512, 1] / [512] also accepted
    b: [1] or [1, 1] f32
    returns: [B, 1] f32
    """
    B, F = x.shape
    assert F == TRAIN_VECTOR_SIZE

    x = jnp.asarray(x, jnp.float32)
    w_row = jnp.asarray(w, jnp.float32).reshape(1, F)   # lane-dense weight row
    b_s = jnp.asarray(b, jnp.float32).reshape(1, 1)     # scalar -> SMEM

    # Edge case only: keep the (sublane-aligned, >=8 row) block inside the array.
    b_eff = B
    if B < 8:
        x = jnp.pad(x, ((0, 8 - B), (0, 0)))             # <= 7 rows, negligible
        b_eff = 8

    # Batch tile: multiple of 8; target >= 2 grid steps (v7x megacore), cap at block_b.
    tb = min(block_b, max(8, _round_up(pl.cdiv(b_eff, 2), 8)))
    num_blocks = pl.cdiv(b_eff, tb)                       # ragged last block is fine

    compiler_kwargs = dict(dimension_semantics=("parallel",))
    # x double-buffers dominate VMEM; raise scoped limit only when the default
    # (16 MiB on v5e) would not cover them (e.g. block_b=4096).
    vmem_needed = 2 * tb * F * 4 + (2 << 20)
    if vmem_needed > (16 << 20):
        compiler_kwargs["vmem_limit_bytes"] = int(vmem_needed)

    out = pl.pallas_call(
        _linear_sigmoid_kernel,
        out_shape=jax.ShapeDtypeStruct((num_blocks, 1, tb), jnp.float32),
        grid=(num_blocks,),
        in_specs=[
            pl.BlockSpec((tb, F), lambda i: (i, 0)),            # x: pipelined tiles
            pl.BlockSpec((1, F), lambda i: (0, 0)),             # w: resident row
            pl.BlockSpec(memory_space=pltpu.MemorySpace.SMEM),  # b: scalar in SMEM
        ],
        out_specs=pl.BlockSpec((1, 1, tb), lambda i: (i, 0, 0)),  # lane-dense store
        compiler_params=pltpu.CompilerParams(**compiler_kwargs),
    )(x, w_row, b_s)

    # (num_blocks, 1, tb) is contiguous in batch order; drop tail rows, back to (B, 1).
    return out.reshape(num_blocks * tb)[:B].reshape(B, 1)


if __name__ == "__main__":
    key = jax.random.PRNGKey(0)
    kx1, kx2, kx3, kw, kb = jax.random.split(key, 5)

    # Deterministic synthetic parameters in PyTorch nn.Linear layout [1, 512].
    bound = 1.0 / jnp.sqrt(jnp.float32(TRAIN_VECTOR_SIZE))
    w = jax.random.uniform(kw, (1, TRAIN_VECTOR_SIZE), dtype=jnp.float32,
                           minval=-bound, maxval=bound)
    b = jax.random.uniform(kb, (1,), dtype=jnp.float32,
                           minval=-bound, maxval=bound)

    def ref_fwd(xin):
        return jax.nn.sigmoid(xin @ w.T + b)

    # batch=8: single aligned block; batch=13: ragged last block (grid=2);
    # batch=40: two blocks with an OOB tail on the last one.
    for bs, kk in ((8, kx1), (13, kx2), (40, kx3)):
        xin = jax.random.normal(kk, (bs, TRAIN_VECTOR_SIZE), dtype=jnp.float32)
        out = neural_network_forward(xin, w, b)
        jax.block_until_ready(out)
        assert out.shape == (bs, 1)
        assert jnp.allclose(out, ref_fwd(xin), atol=1e-5, rtol=1e-5), bs

    print("KERNEL_OK")
</pallas_src>

<mosaic_0001>
module attributes {stable_mosaic.version = 11 : i64} {
  func.func @_linear_sigmoid_kernel(%arg0: i32, %arg1: memref<8x512xf32, #tpu.memory_space<vmem>>, %arg2: memref<1x512xf32, #tpu.memory_space<vmem>>, %arg3: memref<1x1xf32, #tpu.memory_space<smem>>, %arg4: memref<1x1x8xf32, #tpu.memory_space<vmem>>) attributes {dimension_semantics = [#tpu.dimension_semantics<parallel>], iteration_bounds = array<i64: 1>, scalar_prefetch = 0 : i64, scratch_operands = 0 : i64, tpu.core_type = #tpu.core_type<tc>, window_params = [{transform_indices = @transform_0, window_bounds = array<i64: 8, 512>}, {pipeline_mode = #tpu.pipeline_mode<synchronous>, transform_indices = @transform_1, window_bounds = array<i64: 1, 512>}, {transform_indices = @transform_2, window_bounds = array<i64: 1, 1>}, {transform_indices = @transform_3, window_bounds = array<i64: 1, 1, 8>}]} {
    %c0 = arith.constant 0 : index
    %c0_0 = arith.constant 0 : index
    %0 = vector.load %arg1[%c0, %c0_0] : memref<8x512xf32, #tpu.memory_space<vmem>>, vector<8x512xf32>
    %c0_1 = arith.constant 0 : index
    %c0_2 = arith.constant 0 : index
    %1 = vector.load %arg2[%c0_1, %c0_2] : memref<1x512xf32, #tpu.memory_space<vmem>>, vector<1x512xf32>
    %2 = vector.broadcast %1 : vector<1x512xf32> to vector<8x512xf32>
    %3 = arith.mulf %0, %2 : vector<8x512xf32>
    %cst = arith.constant dense<0.000000e+00> : vector<8xf32>
    %4 = vector.multi_reduction <add>, %3, %cst [1] : vector<8x512xf32> to vector<8xf32>
    %c0_3 = arith.constant 0 : index
    %c0_4 = arith.constant 0 : index
    %5 = memref.load %arg3[%c0_3, %c0_4] : memref<1x1xf32, #tpu.memory_space<smem>>
    %6 = vector.broadcast %5 : f32 to vector<8xf32>
    %7 = arith.addf %4, %6 : vector<8xf32>
    %8 = arith.negf %7 : vector<8xf32>
    %9 = math.exp %8 : vector<8xf32>
    %cst_5 = arith.constant 1.000000e+00 : f32
    %10 = vector.broadcast %cst_5 : f32 to vector<8xf32>
    %11 = arith.addf %10, %9 : vector<8xf32>
    %12 = arith.divf %10, %11 : vector<8xf32>
    %13 = vector.shape_cast %12 : vector<8xf32> to vector<1x1x8xf32>
    %c0_6 = arith.constant 0 : index
    %c0_7 = arith.constant 0 : index
    %c0_8 = arith.constant 0 : index
    %14 = vector.load %arg4[%c0_6, %c0_7, %c0_8] : memref<1x1x8xf32, #tpu.memory_space<vmem>>, vector<1x1x8xf32>
    tpu.vector_store %arg4[%c0_6, %c0_7, %c0_8], %13 {strides = array<i32>} : memref<1x1x8xf32, #tpu.memory_space<vmem>>, vector<1x1x8xf32>,
    return
  }
  func.func @transform_0(%arg0: i32) -> (i32, i32) {
    %c0_i32 = arith.constant 0 : i32
    %c0_i32_0 = arith.constant 0 : i32
    return %arg0, %c0_i32 : i32, i32
  }
  func.func @transform_1(%arg0: i32) -> (i32, i32) {
    %c0_i32 = arith.constant 0 : i32
    %c0_i32_0 = arith.constant 0 : i32
    %c0_i32_1 = arith.constant 0 : i32
    return %c0_i32, %c0_i32_0 : i32, i32
  }
  func.func @transform_2(%arg0: i32) -> (i32, i32) {
    %c0_i32 = arith.constant 0 : i32
    %c0_i32_0 = arith.constant 0 : i32
    %c0_i32_1 = arith.constant 0 : i32
    return %c0_i32, %c0_i32_0 : i32, i32
  }
  func.func @transform_3(%arg0: i32) -> (i32, i32, i32) {
    %c0_i32 = arith.constant 0 : i32
    %c0_i32_0 = arith.constant 0 : i32
    %c0_i32_1 = arith.constant 0 : i32
    return %arg0, %c0_i32, %c0_i32_0 : i32, i32, i32
  }
}

</mosaic_0001>

<llo_original>
// kernel: tpu_custom_call.1
$region0: #{tpu_custom_call.1}
  #allocation0 [shape = 'u32[]', space=smem, size = 0x4, offset = 0x4, fixed_abs, tag = 'smem constant byte address 0x4 - core index']
  #allocation1 [shape = 'u32[72,128]{1,0:T(1,128)}', space=vmem, size = 0x9000, scoped, tag = 'internal scratch']
  #allocation2 [shape = 'f32[1,1]{1,0:T(1,128)S(6)}', space=smem, size = 0x200, scoped, tag = 'scoped memory for tpu_custom_call.1']
  %s0 = inlined_call_operand.hbm [shape: f32[8,512], index: 0, kind: input, shape index: {}]
  %s1 = inlined_call_operand.hbm [shape: f32[1,512], index: 1, kind: input, shape index: {}]
  %s2 = inlined_call_operand.<no memory space> [shape: f32[1,1], index: 2, kind: input, shape index: {}]
  %s3 = inlined_call_operand.hbm [shape: f32[1,1,8], index: 3, kind: output, shape index: {}]
  %s4 = sld [smem:[#allocation0]]
  $region30: #{tpu_custom_call.1} parent=0
    _
  %s6 = ssub.s32 1, %s4
  %s7 = scalar_select 0, %s6, %s4
  %8 = sst [smem:[#allocation2]] %s2
  $region1: #{tpu_custom_call.1} parent=0
    #allocation3 [shape = 'u8[16384]{0}', space=vmem, size = 0x4000, scoped, tag = 'input window, operand 0, single buffered']
    #allocation4 [shape = 's32[1]{0}', space=sflag, size = 0x4, scoped, tag = 'scoped memory for tpu_custom_call.1']
    #allocation5 [shape = 's32[1]{0}', space=sflag, size = 0x4, scoped, tag = 'scoped memory for tpu_custom_call.1']
    #allocation6 [shape = 'u8[2048]{0}', space=vmem, size = 0x800, scoped, tag = 'input window, operand 1, single buffered']
    #allocation7 [shape = 's32[1]{0}', space=sflag, size = 0x4, scoped, tag = 'scoped memory for tpu_custom_call.1']
    #allocation8 [shape = 'u8[512]{0}', space=vmem, size = 0x400, scoped, tag = 'output window, operand 0, single buffered']
    %9 = vsyncpa [#allocation4], 0
    %10 = vsyncpa [#allocation7], 0
    %11 = vsyncpa [#allocation5], 0
    // Predicated region
    $region2: #{tpu_custom_call.1} parent=1 // pred_check
      _
    $region3: #{tpu_custom_call.1} parent=1 // pred_check_branch
      %13 = sbr.rel (0) target = $region5
    $region4: #{tpu_custom_call.1} parent=1 // pred_region
      %15 = vsyncadd [#allocation4], 0
      %s17 = sshll.u32 %s0, 4
      %s18 = int_to_ptr.hbm [resolvable:$true] %s17
      %s19 = sshll.u32 [#allocation3], 4
      %s20 = int_to_ptr.vmem [resolvable:$true] %s19
      %22 = dma.hbm_to_vmem [thread:$0]  %s18, 512, %s20, [#allocation4]
    $region5: #{tpu_custom_call.1} parent=1 // pred_fallthru
      _
    // Predicated region
    $region6: #{tpu_custom_call.1} parent=1 // pred_check
      _
    $region7: #{tpu_custom_call.1} parent=1 // pred_check_branch
      %24 = sbr.rel (0) target = $region9
    $region8: #{tpu_custom_call.1} parent=1 // pred_region
      %26 = vsyncadd [#allocation7], 0
      %s28 = sshll.u32 %s1, 4
      %s29 = int_to_ptr.hbm [resolvable:$true] %s28
      %s30 = sshll.u32 [#allocation6], 4
      %s31 = int_to_ptr.vmem [resolvable:$true] %s30
      %33 = dma.hbm_to_vmem [thread:$0]  %s29, 64, %s31, [#allocation7]
    $region9: #{tpu_custom_call.1} parent=1 // pred_fallthru
      _
    // Predicated region
    $region10: #{tpu_custom_call.1} parent=1 // pred_check
      _
    $region11: #{tpu_custom_call.1} parent=1 // pred_check_branch
      %35 = sbr.rel (0) target = $region13
    $region12: #{tpu_custom_call.1} parent=1 // pred_region
      _
    $region13: #{tpu_custom_call.1} parent=1 // pred_fallthru
      _
    // Predicated region
    $region14: #{tpu_custom_call.1} parent=1 // pred_check
      _
    $region15: #{tpu_custom_call.1} parent=1 // pred_check_branch
      %37 = sbr.rel (0) target = $region17
    $region16: #{tpu_custom_call.1} parent=1 // pred_region
      %39 = dma.done [#allocation4], 512
    $region17: #{tpu_custom_call.1} parent=1 // pred_fallthru
      _
    // Predicated region
    $region18: #{tpu_custom_call.1} parent=1 // pred_check
      _
    $region19: #{tpu_custom_call.1} parent=1 // pred_check_branch
      %41 = sbr.rel (0) target = $region21
    $region20: #{tpu_custom_call.1} parent=1 // pred_region
      %43 = dma.done [#allocation7], 64
    $region21: #{tpu_custom_call.1} parent=1 // pred_fallthru
      _
    %v44 = vld [vmem:[#allocation3] sm:$0xff]
    %v45 = vld [vmem:[#allocation3 + $0x8] sm:$0xff]
    %v46 = vld [vmem:[#allocation3 + $0x10] sm:$0xff]
    %v47 = vld [vmem:[#allocation3 + $0x18] sm:$0xff]
    %v48 = vld [vmem:[#allocation6] sm:$0xf]
    %v50 = vperm.slane %v48, 0
    %v51 = vperm.slane %v48, 1
    %v52 = vperm.slane %v48, 2
    %v53 = vperm.slane %v48, 3
    %v58 = vmul.f32 %v44, %v50
    %v59 = vmul.f32 %v45, %v51
    %v60 = vmul.f32 %v46, %v52
    %v61 = vmul.f32 %v47, %v53
    %v62 = vadd.f32 %v58, %v59
    %v63 = vadd.f32 %v62, %v60
    %v64 = vadd.f32 %v63, %v61
    %65 = vadd.xlane.f32.xlu0 %v64
    %v66 = vpop.xlane.xlu0 %65
    %s67 = sld [smem:[#allocation2]]
    %v68 = vstv %s67
    %v69 = vadd.f32 %v66, %v68
    %v70 = vxor.u32 %v69, 2147483648
    %v71 = vmul.f32 %v70, 1.442695
    %v72 = vpow.pop %v71
    %v73 = vadd.f32 %v72, 1.0
    %v74 = vrcp.pop %v73
    %v75 = vmul.f32 %v73, %v74
    %v76 = vsub.f32 1.0, %v75
    %v77 = vmul.f32 %v74, %v76
    %v78 = vadd.f32 %v74, %v77
    %vm79 = vweird.f32 %v73
    %vm80 = vweird.f32 %v74
    %vm81 = vmor %vm79, %vm80
    %v82 = vsel %vm81, %v74, %v78
    %v83 = vand.u32 2147483647, %v73
    %vm84 = vcmp.eq.f32.partialorder %v83, 8.507059e+37
    %v85 = vand.u32 %v73, 2147483648
    %v86 = vor.u32 1.1754944e-38, %v85
    %v87 = vsel %vm84, %v86, %v82
    %v88 = vmul.f32 1.0, %v87
    %v90 = vlaneseq
    %v91 = vand.u32 %v90, 127
    %v92 = vperm.slane %v88, %v91
    %vm94 = vcmask 57344
    %95 = vst.msk [vmem:[#allocation8] sm:$0x1] %vm94, %v92
    // Predicated region
    $region22: #{tpu_custom_call.1} parent=1 // pred_check
      _
    $region23: #{tpu_custom_call.1} parent=1 // pred_check_branch
      %97 = sbr.rel (0) target = $region25
    $region24: #{tpu_custom_call.1} parent=1 // pred_region
      %99 = vsyncadd [#allocation5], 0
      %s101 = sshll.u32 [#allocation8], 4
      %s102 = int_to_ptr.vmem [resolvable:$true] %s101
      %s103 = sshll.u32 %s3, 4
      %s104 = int_to_ptr.hbm [resolvable:$true] %s103
      %106 = dma.vmem_to_hbm [thread:$0]  %s102, 16, %s104, [#allocation5]
    $region25: #{tpu_custom_call.1} parent=1 // pred_fallthru
      _
    // Predicated region
    $region26: #{tpu_custom_call.1} parent=1 // pred_check
      _
    $region27: #{tpu_custom_call.1} parent=1 // pred_check_branch
      %108 = sbr.rel (0) target = $region29
    $region28: #{tpu_custom_call.1} parent=1 // pred_region
      %110 = dma.done [#allocation5], 16
    $region29: #{tpu_custom_call.1} parent=1 // pred_fallthru
      _
    %111 = vsyncpa [#allocation4], 1
    %112 = vsyncpa [#allocation7], 1
    %113 = vsyncpa [#allocation5], 1

</llo_original>
